<compile_context>
chip_gen: v5e
topology: v5e:2x2
jax: 0.10.0
libtpu: 0.0.40
codegen_flags: <defaults>
</compile_context>

<pallas_src>
import jax
import jax.numpy as jnp
from jax.experimental import pallas as pl
from jax.experimental.pallas import tpu as pltpu

_NEG = -1e30  # "-inf" stand-in that never produces NaN/inf in the combines


# ----------------------------- math helpers -----------------------------------

def _softplus(v):
    # log(1 + exp(v)) = max(v, 0) + log(1 + exp(-|v|))  -- one exp, one log
    return jnp.maximum(v, 0.0) + jnp.log(1.0 + jnp.exp(-jnp.abs(v)))


def _log_g(v):
    # log of g(x) = where(x >= 0, x + 0.5, sigmoid(x))
    return jnp.where(v >= 0.0, jnp.log(jnp.maximum(v, 0.0) + 0.5), -_softplus(-v))


# ----------------------------------- kernel -----------------------------------

def minlstm_kernel(x_ref, logh0_ref, w_ref, b_ref, o_ref, acc_c, rm_c, rs_c):
    # x_ref:     (1, tT, Dp)  bf16
    # logh0_ref: (1, 1, tH)   f32
    # w_ref:     (Dp, 3*tH)   bf16   (per-H-block interleaved [f | i | h] cols)
    # b_ref:     (1, 3*tH)    f32
    # o_ref:     (1, tT, tH)  out dtype
    # acc_c / rm_c / rs_c: (1, tH) f32 scratch carried across the T-chunk axis:
    #   acc_c = cumulative a_star, rm_c + log(rs_c) = running logcumsumexp.
    c = pl.program_id(2)

    @pl.when(c == 0)
    def _():
        acc_c[...] = jnp.zeros_like(acc_c)
        rm_c[...] = logh0_ref[0].astype(jnp.float32)     # h0 term, a_star_0 = 0
        rs_c[...] = jnp.ones_like(rs_c)

    tT = o_ref.shape[1]
    tH = o_ref.shape[2]

    # ---- fused 3-gate projection: one bf16 MXU matmul, f32 accumulation ------
    z = jnp.dot(x_ref[0], w_ref[...],
                preferred_element_type=jnp.float32) + b_ref[...]    # (tT, 3*tH)

    row = jax.lax.broadcasted_iota(jnp.int32, (tT, 1), 0)   # sublane iota mask base

    # ---- 128-lane H strips: bound vreg live set of the time scans ------------
    for j in range(tH // 128):
        a0, a1 = j * 128, (j + 1) * 128
        zf = z[:, a0:a1]
        zi = z[:, tH + a0:tH + a1]
        zh = z[:, 2 * tH + a0:2 * tH + a1]

        diff = _softplus(-zf) - _softplus(-zi)
        log_f = -_softplus(diff)
        # softplus(-d) = softplus(d) - d  =>  log_i = diff + log_f
        logv = (diff + log_f) + _log_g(zh)                   # log_i + log_g(h~)

        # inclusive cumsum of log_f over time (exact f32 Hillis-Steele; adds only)
        cum = log_f
        s = 1
        while s < tT:
            cum = cum + jnp.where(row >= s, pltpu.roll(cum, s, axis=0), 0.0)
            s *= 2
        acc = acc_c[:, a0:a1] + cum                          # a_star per row

        # inclusive logcumsumexp of (logv - acc) over time, carried as a
        # (max m, scaled sum s) pair: one exp per combine, no logs.
        m = logv - acc
        sc = jnp.ones_like(m)
        s = 1
        while s < tT:
            keep = row >= s
            pm = jnp.where(keep, pltpu.roll(m, s, axis=0), _NEG)
            ps = jnp.where(keep, pltpu.roll(sc, s, axis=0), 0.0)
            e = jnp.exp(-jnp.abs(m - pm))
            sc = jnp.where(m >= pm, sc + e * ps, e * sc + ps)
            m = jnp.maximum(m, pm)
            s *= 2

        # fold in the running carry (h0 term + all previous chunks)
        cm = rm_c[:, a0:a1]
        cs = rs_c[:, a0:a1]
        e = jnp.exp(-jnp.abs(m - cm))
        s_fin = jnp.where(m >= cm, sc + e * cs, e * sc + cs)
        m_fin = jnp.maximum(m, cm)

        # h = exp(a_star + logcumsumexp) = exp(acc + m) * s   (no log anywhere)
        o_ref[0, :, a0:a1] = (jnp.exp(acc + m_fin) * s_fin).astype(o_ref.dtype)

        # carry last row of the chunk to the next chunk
        acc_c[:, a0:a1] = acc[tT - 1:tT, :]
        rm_c[:, a0:a1] = m_fin[tT - 1:tT, :]
        rs_c[:, a0:a1] = s_fin[tT - 1:tT, :]


# ----------------------------------- wrapper -----------------------------------

def _round_up(a, m):
    return (a + m - 1) // m * m


def minlstm_forward(x, params, h_0=None, *, t_chunk=None, h_chunk=None,
                    out_dtype=jnp.float32):
    """x: (B, T, D) float32. Returns h: (B, T, H) in out_dtype (default f32)."""
    B, T, D = x.shape
    H = params["wf"].shape[1]
    Hp = _round_up(H, 128)
    Dp = _round_up(D, 16)

    # time chunk: power of two in [16, 128] (bf16 min sublane tile is 16)
    if t_chunk is None:
        t_chunk = 16
        while t_chunk < 128 and t_chunk * 2 <= T:
            t_chunk *= 2
    tT = int(t_chunk)
    assert tT >= 16 and (tT & (tT - 1)) == 0, "t_chunk must be a power of two >= 16"
    Tp = _round_up(max(T, tT), tT)

    # hidden chunk: largest divisor of Hp that is a multiple of 128 and <= 512
    if h_chunk is None:
        h_chunk = 128
        for cand in (512, 384, 256, 128):
            if cand <= Hp and Hp % cand == 0:
                h_chunk = cand
                break
    tH = int(h_chunk)
    assert tH % 128 == 0 and Hp % tH == 0

    nH, nC = Hp // tH, Tp // tT

    if h_0 is None:
        h_0 = jnp.zeros((B, 1, H), jnp.float32)

    # pad x along T and D, cast to bf16 (halves x DMA bytes; matmul accums f32)
    xp = jnp.pad(x, ((0, 0), (0, Tp - T), (0, Dp - D))).astype(jnp.bfloat16)

    def pad_w(w):
        return jnp.pad(w, ((0, Dp - D), (0, Hp - H)))

    def pad_b(b):
        return jnp.pad(b.reshape(1, H), ((0, 0), (0, Hp - H)))

    wf, wi, wh = pad_w(params["wf"]), pad_w(params["wi"]), pad_w(params["wh"])
    bf, bi, bh = pad_b(params["bf"]), pad_b(params["bi"]), pad_b(params["bh"])

    # interleave gates per H block: columns of block h are [f_h | i_h | h_h]
    w_all = jnp.stack([wf.reshape(Dp, nH, tH),
                       wi.reshape(Dp, nH, tH),
                       wh.reshape(Dp, nH, tH)], axis=2).reshape(Dp, 3 * Hp)
    b_all = jnp.stack([bf.reshape(1, nH, tH),
                       bi.reshape(1, nH, tH),
                       bh.reshape(1, nH, tH)], axis=2).reshape(1, 3 * Hp)
    w_all = w_all.astype(jnp.bfloat16)
    b_all = b_all.astype(jnp.float32)

    h0p = jnp.pad(h_0.astype(jnp.float32), ((0, 0), (0, 0), (0, Hp - H)))
    log_h0 = _log_g(h0p)                                            # (B, 1, Hp)

    # advisory cost estimate + VMEM budget derived from the actual tiles
    log2_tT = tT.bit_length() - 1
    out_isize = jnp.dtype(out_dtype).itemsize
    cost = pl.CostEstimate(
        flops=int(2 * B * Tp * Dp * 3 * Hp + 10 * B * Tp * Hp * log2_tT),
        transcendentals=int(B * Tp * Hp * (8 + log2_tT)),
        bytes_accessed=int(nH * B * Tp * Dp * 2 + B * nC * Dp * 3 * Hp * 2
                           + B * Tp * Hp * out_isize + B * Hp * 4),
    )
    est = (2 * (tT * Dp * 2 + Dp * 3 * tH * 2 + 3 * tH * 4 + tH * 4
                + tT * tH * out_isize)
           + tT * 3 * tH * 4 + 16 * tT * 128 * 4 + 3 * tH * 4)
    vmem_limit = max(32 << 20, min(2 * est + (4 << 20), 48 << 20))

    out = pl.pallas_call(
        minlstm_kernel,
        out_shape=jax.ShapeDtypeStruct((B, Tp, Hp), out_dtype),
        grid=(nH, B, nC),
        in_specs=[
            pl.BlockSpec((1, tT, Dp), lambda h, b, c: (b, c, 0)),    # x
            pl.BlockSpec((1, 1, tH), lambda h, b, c: (b, 0, h)),     # log_g(h_0)
            pl.BlockSpec((Dp, 3 * tH), lambda h, b, c: (0, h)),      # fused W
            pl.BlockSpec((1, 3 * tH), lambda h, b, c: (0, h)),       # fused b
        ],
        out_specs=pl.BlockSpec((1, tT, tH), lambda h, b, c: (b, c, h)),
        scratch_shapes=[pltpu.VMEM((1, tH), jnp.float32),            # a_star carry
                        pltpu.VMEM((1, tH), jnp.float32),            # running max
                        pltpu.VMEM((1, tH), jnp.float32)],           # running scaled sum
        compiler_params=pltpu.CompilerParams(
            dimension_semantics=("parallel", "parallel", "arbitrary"),
            vmem_limit_bytes=int(vmem_limit)),
        cost_estimate=cost,
    )(xp, log_h0, w_all, b_all)

    if Tp == T and Hp == H:
        return out
    return out[:, :T, :H]


# ------------------------------ pure-JAX reference ------------------------------

def minlstm_reference(x, params, h_0=None):
    """Matches the kernel's numerics (bf16 matmul inputs, f32 everywhere else)."""
    B, T, D = x.shape
    H = params["wf"].shape[1]
    if h_0 is None:
        h_0 = jnp.zeros((B, 1, H), jnp.float32)
    xb = x.astype(jnp.bfloat16)

    def proj(w, b):
        z = jnp.dot(xb.reshape(B * T, D), w.astype(jnp.bfloat16),
                    preferred_element_type=jnp.float32)
        return z.reshape(B, T, H) + b

    zf = proj(params["wf"], params["bf"])
    zi = proj(params["wi"], params["bi"])
    zh = proj(params["wh"], params["bh"])
    diff = _softplus(-zf) - _softplus(-zi)
    log_f = -_softplus(diff)
    log_i = -_softplus(-diff)
    log_values = jnp.concatenate(
        [_log_g(h_0.astype(jnp.float32)), log_i + _log_g(zh)], axis=1)
    a_star = jnp.pad(jnp.cumsum(log_f, axis=1), ((0, 0), (1, 0), (0, 0)))
    log_h0_plus_b_star = jax.lax.associative_scan(jnp.logaddexp,
                                                  log_values - a_star, axis=1)
    log_h = a_star + log_h0_plus_b_star
    return jnp.exp(log_h)[:, 1:]


# ----------------------------------- params -----------------------------------

def init_params(key, input_size, hidden_size):
    # nn.Linear default init: U(-1/sqrt(fan_in), 1/sqrt(fan_in)); stored as (D, H).
    k = 1.0 / jnp.sqrt(jnp.float32(input_size))
    keys = jax.random.split(key, 6)
    u = lambda kk, shape: jax.random.uniform(kk, shape, jnp.float32, -k, k)
    return {
        "wf": u(keys[0], (input_size, hidden_size)), "bf": u(keys[1], (hidden_size,)),
        "wi": u(keys[2], (input_size, hidden_size)), "bi": u(keys[3], (hidden_size,)),
        "wh": u(keys[4], (input_size, hidden_size)), "bh": u(keys[5], (hidden_size,)),
    }


if __name__ == "__main__":
    root = jax.random.PRNGKey(0)
    k1, k2, k3, k4, k5 = jax.random.split(root, 5)

    # Test 1: module-spec-sized shapes (single T chunk, single H strip).
    B, T, D, H = 2, 8, 32, 32
    x = jax.random.normal(k1, (B, T, D), jnp.float32)
    params = init_params(k2, D, H)
    h = jax.block_until_ready(minlstm_forward(x, params))
    h_ref = minlstm_reference(x, params)
    assert h.shape == (B, T, H)
    assert jnp.allclose(h, h_ref, atol=1e-3, rtol=1e-3), "test1 mismatch vs reference"

    # Test 2: exercises T-chunk carry, two H strips, D/H/T padding, nonzero h_0.
    B2, T2, D2, H2 = 2, 40, 24, 200
    x2 = jax.random.normal(k3, (B2, T2, D2), jnp.float32)
    params2 = init_params(k4, D2, H2)
    h0 = 0.5 * jax.random.normal(k5, (B2, 1, H2), jnp.float32)
    h2 = jax.block_until_ready(minlstm_forward(x2, params2, h0))
    h2_ref = minlstm_reference(x2, params2, h0)
    assert h2.shape == (B2, T2, H2)
    assert jnp.allclose(h2, h2_ref, atol=1e-3, rtol=1e-3), "test2 mismatch vs reference"

    print("KERNEL_OK")
</pallas_src>

<mosaic_0001>
module attributes {stable_mosaic.version = 11 : i64} {
  func.func @minlstm_kernel(%arg0: i32, %arg1: i32, %arg2: i32, %arg3: memref<1x16x32xbf16, #tpu.memory_space<vmem>>, %arg4: memref<1x1x128xf32, #tpu.memory_space<vmem>>, %arg5: memref<32x384xbf16, #tpu.memory_space<vmem>>, %arg6: memref<1x384xf32, #tpu.memory_space<vmem>>, %arg7: memref<1x16x128xf32, #tpu.memory_space<vmem>>, %arg8: memref<1x128xf32, #tpu.memory_space<vmem>>, %arg9: memref<1x128xf32, #tpu.memory_space<vmem>>, %arg10: memref<1x128xf32, #tpu.memory_space<vmem>>) attributes {dimension_semantics = [#tpu.dimension_semantics<parallel>, #tpu.dimension_semantics<parallel>, #tpu.dimension_semantics<arbitrary>], iteration_bounds = array<i64: 1, 2, 1>, scalar_prefetch = 0 : i64, scratch_operands = 3 : i64, tpu.core_type = #tpu.core_type<tc>, window_params = [{transform_indices = @transform_0, window_bounds = array<i64: 1, 16, 32>}, {transform_indices = @transform_1, window_bounds = array<i64: 1, 1, 128>}, {transform_indices = @transform_2, window_bounds = array<i64: 32, 384>}, {transform_indices = @transform_3, window_bounds = array<i64: 1, 384>}, {transform_indices = @transform_4, window_bounds = array<i64: 1, 16, 128>}]} {
    %c0_i32 = arith.constant 0 : i32
    %0 = arith.cmpi eq, %arg2, %c0_i32 : i32
    %1 = arith.extui %0 : i1 to i32
    %c0_i32_0 = arith.constant 0 : i32
    %2 = arith.cmpi ne, %1, %c0_i32_0 : i32
    scf.if %2 {
      %cst_76 = arith.constant 0.000000e+00 : f32
      %239 = vector.broadcast %cst_76 : f32 to vector<1x128xf32>
      %c0_77 = arith.constant 0 : index
      %c0_78 = arith.constant 0 : index
      %240 = vector.load %arg8[%c0_77, %c0_78] : memref<1x128xf32, #tpu.memory_space<vmem>>, vector<1x128xf32>
      tpu.vector_store %arg8[%c0_77, %c0_78], %239 {strides = array<i32>} : memref<1x128xf32, #tpu.memory_space<vmem>>, vector<1x128xf32>,
      %c0_79 = arith.constant 0 : index
      %c0_80 = arith.constant 0 : index
      %c0_81 = arith.constant 0 : index
      %241 = vector.load %arg4[%c0_79, %c0_80, %c0_81] : memref<1x1x128xf32, #tpu.memory_space<vmem>>, vector<1x1x128xf32>
      %242 = vector.shape_cast %241 : vector<1x1x128xf32> to vector<1x128xf32>
      %c0_82 = arith.constant 0 : index
      %c0_83 = arith.constant 0 : index
      %243 = vector.load %arg9[%c0_82, %c0_83] : memref<1x128xf32, #tpu.memory_space<vmem>>, vector<1x128xf32>
      tpu.vector_store %arg9[%c0_82, %c0_83], %242 {strides = array<i32>} : memref<1x128xf32, #tpu.memory_space<vmem>>, vector<1x128xf32>,
      %cst_84 = arith.constant 1.000000e+00 : f32
      %244 = vector.broadcast %cst_84 : f32 to vector<1x128xf32>
      %c0_85 = arith.constant 0 : index
      %c0_86 = arith.constant 0 : index
      %245 = vector.load %arg10[%c0_85, %c0_86] : memref<1x128xf32, #tpu.memory_space<vmem>>, vector<1x128xf32>
      tpu.vector_store %arg10[%c0_85, %c0_86], %244 {strides = array<i32>} : memref<1x128xf32, #tpu.memory_space<vmem>>, vector<1x128xf32>,
    } else {
    }
    %c0 = arith.constant 0 : index
    %c0_1 = arith.constant 0 : index
    %c0_2 = arith.constant 0 : index
    %3 = vector.load %arg3[%c0, %c0_1, %c0_2] : memref<1x16x32xbf16, #tpu.memory_space<vmem>>, vector<1x16x32xbf16>
    %4 = vector.shape_cast %3 : vector<1x16x32xbf16> to vector<16x32xbf16>
    %c0_3 = arith.constant 0 : index
    %c0_4 = arith.constant 0 : index
    %5 = vector.load %arg5[%c0_3, %c0_4] : memref<32x384xbf16, #tpu.memory_space<vmem>>, vector<32x384xbf16>
    %cst = arith.constant dense<0.000000e+00> : vector<16x384xf32>
    %6 = tpu.matmul %4, %5, %cst {dimension_numbers = #tpu.dot_dimension_numbers<[1], [0], [0], [1], [0, 0, 1, 1], [], []>} : vector<16x32xbf16>, vector<32x384xbf16>, vector<16x384xf32> -> vector<16x384xf32>
    %c0_5 = arith.constant 0 : index
    %c0_6 = arith.constant 0 : index
    %7 = vector.load %arg6[%c0_5, %c0_6] : memref<1x384xf32, #tpu.memory_space<vmem>>, vector<1x384xf32>
    %8 = vector.broadcast %7 : vector<1x384xf32> to vector<16x384xf32>
    %9 = arith.addf %6, %8 : vector<16x384xf32>
    %10 = tpu.iota {dimensions = array<i32: 0>} : vector<16x1xi32>
    %11 = vector.extract_strided_slice %9 {offsets = [0, 0], sizes = [16, 128], strides = [1, 1]} : vector<16x384xf32> to vector<16x128xf32>
    %12 = vector.extract_strided_slice %9 {offsets = [0, 128], sizes = [16, 128], strides = [1, 1]} : vector<16x384xf32> to vector<16x128xf32>
    %13 = vector.extract_strided_slice %9 {offsets = [0, 256], sizes = [16, 128], strides = [1, 1]} : vector<16x384xf32> to vector<16x128xf32>
    %cst_7 = arith.constant 0.000000e+00 : f32
    %14 = vector.broadcast %cst_7 : f32 to vector<16x128xf32>
    %15 = arith.subf %14, %11 : vector<16x128xf32>
    %cst_8 = arith.constant 0.000000e+00 : f32
    %16 = vector.broadcast %cst_8 : f32 to vector<16x128xf32>
    %17 = arith.maximumf %15, %16 : vector<16x128xf32>
    %18 = math.absf %15 : vector<16x128xf32>
    %cst_9 = arith.constant 0.000000e+00 : f32
    %19 = vector.broadcast %cst_9 : f32 to vector<16x128xf32>
    %20 = arith.subf %19, %18 : vector<16x128xf32>
    %21 = math.exp %20 : vector<16x128xf32>
    %cst_10 = arith.constant 1.000000e+00 : f32
    %22 = vector.broadcast %cst_10 : f32 to vector<16x128xf32>
    %23 = arith.addf %22, %21 : vector<16x128xf32>
    %24 = math.log %23 : vector<16x128xf32>
    %25 = arith.addf %17, %24 : vector<16x128xf32>
    %cst_11 = arith.constant 0.000000e+00 : f32
    %26 = vector.broadcast %cst_11 : f32 to vector<16x128xf32>
    %27 = arith.subf %26, %12 : vector<16x128xf32>
    %cst_12 = arith.constant 0.000000e+00 : f32
    %28 = vector.broadcast %cst_12 : f32 to vector<16x128xf32>
    %29 = arith.maximumf %27, %28 : vector<16x128xf32>
    %30 = math.absf %27 : vector<16x128xf32>
    %cst_13 = arith.constant 0.000000e+00 : f32
    %31 = vector.broadcast %cst_13 : f32 to vector<16x128xf32>
    %32 = arith.subf %31, %30 : vector<16x128xf32>
    %33 = math.exp %32 : vector<16x128xf32>
    %cst_14 = arith.constant 1.000000e+00 : f32
    %34 = vector.broadcast %cst_14 : f32 to vector<16x128xf32>
    %35 = arith.addf %34, %33 : vector<16x128xf32>
    %36 = math.log %35 : vector<16x128xf32>
    %37 = arith.addf %29, %36 : vector<16x128xf32>
    %38 = arith.subf %25, %37 : vector<16x128xf32>
    %cst_15 = arith.constant 0.000000e+00 : f32
    %39 = vector.broadcast %cst_15 : f32 to vector<16x128xf32>
    %40 = arith.maximumf %38, %39 : vector<16x128xf32>
    %41 = math.absf %38 : vector<16x128xf32>
    %cst_16 = arith.constant 0.000000e+00 : f32
    %42 = vector.broadcast %cst_16 : f32 to vector<16x128xf32>
    %43 = arith.subf %42, %41 : vector<16x128xf32>
    %44 = math.exp %43 : vector<16x128xf32>
    %cst_17 = arith.constant 1.000000e+00 : f32
    %45 = vector.broadcast %cst_17 : f32 to vector<16x128xf32>
    %46 = arith.addf %45, %44 : vector<16x128xf32>
    %47 = math.log %46 : vector<16x128xf32>
    %48 = arith.addf %40, %47 : vector<16x128xf32>
    %cst_18 = arith.constant 0.000000e+00 : f32
    %49 = vector.broadcast %cst_18 : f32 to vector<16x128xf32>
    %50 = arith.subf %49, %48 : vector<16x128xf32>
    %51 = arith.addf %38, %50 : vector<16x128xf32>
    %cst_19 = arith.constant 0.000000e+00 : f32
    %52 = vector.broadcast %cst_19 : f32 to vector<16x128xf32>
    %53 = arith.cmpf oge, %13, %52 : vector<16x128xf32>
    %cst_20 = arith.constant 0.000000e+00 : f32
    %54 = vector.broadcast %cst_20 : f32 to vector<16x128xf32>
    %55 = arith.maximumf %13, %54 : vector<16x128xf32>
    %cst_21 = arith.constant 5.000000e-01 : f32
    %56 = vector.broadcast %cst_21 : f32 to vector<16x128xf32>
    %57 = arith.addf %55, %56 : vector<16x128xf32>
    %58 = math.log %57 : vector<16x128xf32>
    %cst_22 = arith.constant 0.000000e+00 : f32
    %59 = vector.broadcast %cst_22 : f32 to vector<16x128xf32>
    %60 = arith.subf %59, %13 : vector<16x128xf32>
    %cst_23 = arith.constant 0.000000e+00 : f32
    %61 = vector.broadcast %cst_23 : f32 to vector<16x128xf32>
    %62 = arith.maximumf %60, %61 : vector<16x128xf32>
    %63 = math.absf %60 : vector<16x128xf32>
    %cst_24 = arith.constant 0.000000e+00 : f32
    %64 = vector.broadcast %cst_24 : f32 to vector<16x128xf32>
    %65 = arith.subf %64, %63 : vector<16x128xf32>
    %66 = math.exp %65 : vector<16x128xf32>
    %cst_25 = arith.constant 1.000000e+00 : f32
    %67 = vector.broadcast %cst_25 : f32 to vector<16x128xf32>
    %68 = arith.addf %67, %66 : vector<16x128xf32>
    %69 = math.log %68 : vector<16x128xf32>
    %70 = arith.addf %62, %69 : vector<16x128xf32>
    %cst_26 = arith.constant 0.000000e+00 : f32
    %71 = vector.broadcast %cst_26 : f32 to vector<16x128xf32>
    %72 = arith.subf %71, %70 : vector<16x128xf32>
    %73 = arith.select %53, %58, %72 : vector<16x128xi1>, vector<16x128xf32>
    %74 = arith.addf %51, %73 : vector<16x128xf32>
    %c1_i32 = arith.constant 1 : i32
    %75 = vector.broadcast %c1_i32 : i32 to vector<16x1xi32>
    %76 = arith.cmpi sge, %10, %75 : vector<16x1xi32>
    %c1_i32_27 = arith.constant 1 : i32
    %77 = tpu.dynamic_rotate %50 by %c1_i32_27 dim 0 : vector<16x128xf32>, i32 -> vector<16x128xf32>
    %cst_28 = arith.constant 0.000000e+00 : f32
    %78 = vector.shape_cast %76 : vector<16x1xi1> to vector<16x1xi1>
    %79 = vector.broadcast %78 : vector<16x1xi1> to vector<16x128xi1>
    %80 = vector.broadcast %cst_28 : f32 to vector<16x128xf32>
    %81 = arith.select %79, %77, %80 : vector<16x128xi1>, vector<16x128xf32>
    %82 = arith.addf %50, %81 : vector<16x128xf32>
    %c2_i32 = arith.constant 2 : i32
    %83 = vector.broadcast %c2_i32 : i32 to vector<16x1xi32>
    %84 = arith.cmpi sge, %10, %83 : vector<16x1xi32>
    %c2_i32_29 = arith.constant 2 : i32
    %85 = tpu.dynamic_rotate %82 by %c2_i32_29 dim 0 : vector<16x128xf32>, i32 -> vector<16x128xf32>
    %cst_30 = arith.constant 0.000000e+00 : f32
    %86 = vector.shape_cast %84 : vector<16x1xi1> to vector<16x1xi1>
    %87 = vector.broadcast %86 : vector<16x1xi1> to vector<16x128xi1>
    %88 = vector.broadcast %cst_30 : f32 to vector<16x128xf32>
    %89 = arith.select %87, %85, %88 : vector<16x128xi1>, vector<16x128xf32>
    %90 = arith.addf %82, %89 : vector<16x128xf32>
    %c4_i32 = arith.constant 4 : i32
    %91 = vector.broadcast %c4_i32 : i32 to vector<16x1xi32>
    %92 = arith.cmpi sge, %10, %91 : vector<16x1xi32>
    %c4_i32_31 = arith.constant 4 : i32
    %93 = tpu.dynamic_rotate %90 by %c4_i32_31 dim 0 : vector<16x128xf32>, i32 -> vector<16x128xf32>
    %cst_32 = arith.constant 0.000000e+00 : f32
    %94 = vector.shape_cast %92 : vector<16x1xi1> to vector<16x1xi1>
    %95 = vector.broadcast %94 : vector<16x1xi1> to vector<16x128xi1>
    %96 = vector.broadcast %cst_32 : f32 to vector<16x128xf32>
    %97 = arith.select %95, %93, %96 : vector<16x128xi1>, vector<16x128xf32>
    %98 = arith.addf %90, %97 : vector<16x128xf32>
    %c8_i32 = arith.constant 8 : i32
    %99 = vector.broadcast %c8_i32 : i32 to vector<16x1xi32>
    %100 = arith.cmpi sge, %10, %99 : vector<16x1xi32>
    %c8_i32_33 = arith.constant 8 : i32
    %101 = tpu.dynamic_rotate %98 by %c8_i32_33 dim 0 : vector<16x128xf32>, i32 -> vector<16x128xf32>
    %cst_34 = arith.constant 0.000000e+00 : f32
    %102 = vector.shape_cast %100 : vector<16x1xi1> to vector<16x1xi1>
    %103 = vector.broadcast %102 : vector<16x1xi1> to vector<16x128xi1>
    %104 = vector.broadcast %cst_34 : f32 to vector<16x128xf32>
    %105 = arith.select %103, %101, %104 : vector<16x128xi1>, vector<16x128xf32>
    %106 = arith.addf %98, %105 : vector<16x128xf32>
    %c0_35 = arith.constant 0 : index
    %c0_36 = arith.constant 0 : index
    %107 = vector.load %arg8[%c0_35, %c0_36] : memref<1x128xf32, #tpu.memory_space<vmem>>, vector<1x128xf32>
    %108 = vector.broadcast %107 : vector<1x128xf32> to vector<16x128xf32>
    %109 = arith.addf %108, %106 : vector<16x128xf32>
    %110 = arith.subf %74, %109 : vector<16x128xf32>
    %cst_37 = arith.constant 1.000000e+00 : f32
    %111 = vector.broadcast %cst_37 : f32 to vector<16x128xf32>
    %c1_i32_38 = arith.constant 1 : i32
    %112 = vector.broadcast %c1_i32_38 : i32 to vector<16x1xi32>
    %113 = arith.cmpi sge, %10, %112 : vector<16x1xi32>
    %c1_i32_39 = arith.constant 1 : i32
    %114 = tpu.dynamic_rotate %110 by %c1_i32_39 dim 0 : vector<16x128xf32>, i32 -> vector<16x128xf32>
    %cst_40 = arith.constant -1.000000e+30 : f32
    %115 = vector.shape_cast %113 : vector<16x1xi1> to vector<16x1xi1>
    %116 = vector.broadcast %115 : vector<16x1xi1> to vector<16x128xi1>
    %117 = vector.broadcast %cst_40 : f32 to vector<16x128xf32>
    %118 = arith.select %116, %114, %117 : vector<16x128xi1>, vector<16x128xf32>
    %c1_i32_41 = arith.constant 1 : i32
    %119 = tpu.dynamic_rotate %111 by %c1_i32_41 dim 0 : vector<16x128xf32>, i32 -> vector<16x128xf32>
    %cst_42 = arith.constant 0.000000e+00 : f32
    %120 = vector.shape_cast %113 : vector<16x1xi1> to vector<16x1xi1>
    %121 = vector.broadcast %120 : vector<16x1xi1> to vector<16x128xi1>
    %122 = vector.broadcast %cst_42 : f32 to vector<16x128xf32>
    %123 = arith.select %121, %119, %122 : vector<16x128xi1>, vector<16x128xf32>
    %124 = arith.subf %110, %118 : vector<16x128xf32>
    %125 = math.absf %124 : vector<16x128xf32>
    %cst_43 = arith.constant 0.000000e+00 : f32
    %126 = vector.broadcast %cst_43 : f32 to vector<16x128xf32>
    %127 = arith.subf %126, %125 : vector<16x128xf32>
    %128 = math.exp %127 : vector<16x128xf32>
    %129 = arith.cmpf oge, %110, %118 : vector<16x128xf32>
    %130 = arith.mulf %128, %123 : vector<16x128xf32>
    %131 = arith.addf %111, %130 : vector<16x128xf32>
    %132 = arith.mulf %128, %111 : vector<16x128xf32>
    %133 = arith.addf %132, %123 : vector<16x128xf32>
    %134 = arith.select %129, %131, %133 : vector<16x128xi1>, vector<16x128xf32>
    %135 = arith.maximumf %110, %118 : vector<16x128xf32>
    %c2_i32_44 = arith.constant 2 : i32
    %136 = vector.broadcast %c2_i32_44 : i32 to vector<16x1xi32>
    %137 = arith.cmpi sge, %10, %136 : vector<16x1xi32>
    %c2_i32_45 = arith.constant 2 : i32
    %138 = tpu.dynamic_rotate %135 by %c2_i32_45 dim 0 : vector<16x128xf32>, i32 -> vector<16x128xf32>
    %cst_46 = arith.constant -1.000000e+30 : f32
    %139 = vector.shape_cast %137 : vector<16x1xi1> to vector<16x1xi1>
    %140 = vector.broadcast %139 : vector<16x1xi1> to vector<16x128xi1>
    %141 = vector.broadcast %cst_46 : f32 to vector<16x128xf32>
    %142 = arith.select %140, %138, %141 : vector<16x128xi1>, vector<16x128xf32>
    %c2_i32_47 = arith.constant 2 : i32
    %143 = tpu.dynamic_rotate %134 by %c2_i32_47 dim 0 : vector<16x128xf32>, i32 -> vector<16x128xf32>
    %cst_48 = arith.constant 0.000000e+00 : f32
    %144 = vector.shape_cast %137 : vector<16x1xi1> to vector<16x1xi1>
    %145 = vector.broadcast %144 : vector<16x1xi1> to vector<16x128xi1>
    %146 = vector.broadcast %cst_48 : f32 to vector<16x128xf32>
    %147 = arith.select %145, %143, %146 : vector<16x128xi1>, vector<16x128xf32>
    %148 = arith.subf %135, %142 : vector<16x128xf32>
    %149 = math.absf %148 : vector<16x128xf32>
    %cst_49 = arith.constant 0.000000e+00 : f32
    %150 = vector.broadcast %cst_49 : f32 to vector<16x128xf32>
    %151 = arith.subf %150, %149 : vector<16x128xf32>
    %152 = math.exp %151 : vector<16x128xf32>
    %153 = arith.cmpf oge, %135, %142 : vector<16x128xf32>
    %154 = arith.mulf %152, %147 : vector<16x128xf32>
    %155 = arith.addf %134, %154 : vector<16x128xf32>
    %156 = arith.mulf %152, %134 : vector<16x128xf32>
    %157 = arith.addf %156, %147 : vector<16x128xf32>
    %158 = arith.select %153, %155, %157 : vector<16x128xi1>, vector<16x128xf32>
    %159 = arith.maximumf %135, %142 : vector<16x128xf32>
    %c4_i32_50 = arith.constant 4 : i32
    %160 = vector.broadcast %c4_i32_50 : i32 to vector<16x1xi32>
    %161 = arith.cmpi sge, %10, %160 : vector<16x1xi32>
    %c4_i32_51 = arith.constant 4 : i32
    %162 = tpu.dynamic_rotate %159 by %c4_i32_51 dim 0 : vector<16x128xf32>, i32 -> vector<16x128xf32>
    %cst_52 = arith.constant -1.000000e+30 : f32
    %163 = vector.shape_cast %161 : vector<16x1xi1> to vector<16x1xi1>
    %164 = vector.broadcast %163 : vector<16x1xi1> to vector<16x128xi1>
    %165 = vector.broadcast %cst_52 : f32 to vector<16x128xf32>
    %166 = arith.select %164, %162, %165 : vector<16x128xi1>, vector<16x128xf32>
    %c4_i32_53 = arith.constant 4 : i32
    %167 = tpu.dynamic_rotate %158 by %c4_i32_53 dim 0 : vector<16x128xf32>, i32 -> vector<16x128xf32>
    %cst_54 = arith.constant 0.000000e+00 : f32
    %168 = vector.shape_cast %161 : vector<16x1xi1> to vector<16x1xi1>
    %169 = vector.broadcast %168 : vector<16x1xi1> to vector<16x128xi1>
    %170 = vector.broadcast %cst_54 : f32 to vector<16x128xf32>
    %171 = arith.select %169, %167, %170 : vector<16x128xi1>, vector<16x128xf32>
    %172 = arith.subf %159, %166 : vector<16x128xf32>
    %173 = math.absf %172 : vector<16x128xf32>
    %cst_55 = arith.constant 0.000000e+00 : f32
    %174 = vector.broadcast %cst_55 : f32 to vector<16x128xf32>
    %175 = arith.subf %174, %173 : vector<16x128xf32>
    %176 = math.exp %175 : vector<16x128xf32>
    %177 = arith.cmpf oge, %159, %166 : vector<16x128xf32>
    %178 = arith.mulf %176, %171 : vector<16x128xf32>
    %179 = arith.addf %158, %178 : vector<16x128xf32>
    %180 = arith.mulf %176, %158 : vector<16x128xf32>
    %181 = arith.addf %180, %171 : vector<16x128xf32>
    %182 = arith.select %177, %179, %181 : vector<16x128xi1>, vector<16x128xf32>
    %183 = arith.maximumf %159, %166 : vector<16x128xf32>
    %c8_i32_56 = arith.constant 8 : i32
    %184 = vector.broadcast %c8_i32_56 : i32 to vector<16x1xi32>
    %185 = arith.cmpi sge, %10, %184 : vector<16x1xi32>
    %c8_i32_57 = arith.constant 8 : i32
    %186 = tpu.dynamic_rotate %183 by %c8_i32_57 dim 0 : vector<16x128xf32>, i32 -> vector<16x128xf32>
    %cst_58 = arith.constant -1.000000e+30 : f32
    %187 = vector.shape_cast %185 : vector<16x1xi1> to vector<16x1xi1>
    %188 = vector.broadcast %187 : vector<16x1xi1> to vector<16x128xi1>
    %189 = vector.broadcast %cst_58 : f32 to vector<16x128xf32>
    %190 = arith.select %188, %186, %189 : vector<16x128xi1>, vector<16x128xf32>
    %c8_i32_59 = arith.constant 8 : i32
    %191 = tpu.dynamic_rotate %182 by %c8_i32_59 dim 0 : vector<16x128xf32>, i32 -> vector<16x128xf32>
    %cst_60 = arith.constant 0.000000e+00 : f32
    %192 = vector.shape_cast %185 : vector<16x1xi1> to vector<16x1xi1>
    %193 = vector.broadcast %192 : vector<16x1xi1> to vector<16x128xi1>
    %194 = vector.broadcast %cst_60 : f32 to vector<16x128xf32>
    %195 = arith.select %193, %191, %194 : vector<16x128xi1>, vector<16x128xf32>
    %196 = arith.subf %183, %190 : vector<16x128xf32>
    %197 = math.absf %196 : vector<16x128xf32>
    %cst_61 = arith.constant 0.000000e+00 : f32
    %198 = vector.broadcast %cst_61 : f32 to vector<16x128xf32>
    %199 = arith.subf %198, %197 : vector<16x128xf32>
    %200 = math.exp %199 : vector<16x128xf32>
    %201 = arith.cmpf oge, %183, %190 : vector<16x128xf32>
    %202 = arith.mulf %200, %195 : vector<16x128xf32>
    %203 = arith.addf %182, %202 : vector<16x128xf32>
    %204 = arith.mulf %200, %182 : vector<16x128xf32>
    %205 = arith.addf %204, %195 : vector<16x128xf32>
    %206 = arith.select %201, %203, %205 : vector<16x128xi1>, vector<16x128xf32>
    %207 = arith.maximumf %183, %190 : vector<16x128xf32>
    %c0_62 = arith.constant 0 : index
    %c0_63 = arith.constant 0 : index
    %208 = vector.load %arg9[%c0_62, %c0_63] : memref<1x128xf32, #tpu.memory_space<vmem>>, vector<1x128xf32>
    %c0_64 = arith.constant 0 : index
    %c0_65 = arith.constant 0 : index
    %209 = vector.load %arg10[%c0_64, %c0_65] : memref<1x128xf32, #tpu.memory_space<vmem>>, vector<1x128xf32>
    %210 = vector.broadcast %208 : vector<1x128xf32> to vector<16x128xf32>
    %211 = arith.subf %207, %210 : vector<16x128xf32>
    %212 = math.absf %211 : vector<16x128xf32>
    %cst_66 = arith.constant 0.000000e+00 : f32
    %213 = vector.broadcast %cst_66 : f32 to vector<16x128xf32>
    %214 = arith.subf %213, %212 : vector<16x128xf32>
    %215 = math.exp %214 : vector<16x128xf32>
    %216 = vector.broadcast %208 : vector<1x128xf32> to vector<16x128xf32>
    %217 = arith.cmpf oge, %207, %216 : vector<16x128xf32>
    %218 = vector.broadcast %209 : vector<1x128xf32> to vector<16x128xf32>
    %219 = arith.mulf %215, %218 : vector<16x128xf32>
    %220 = arith.addf %206, %219 : vector<16x128xf32>
    %221 = arith.mulf %215, %206 : vector<16x128xf32>
    %222 = vector.broadcast %209 : vector<1x128xf32> to vector<16x128xf32>
    %223 = arith.addf %221, %222 : vector<16x128xf32>
    %224 = arith.select %217, %220, %223 : vector<16x128xi1>, vector<16x128xf32>
    %225 = vector.broadcast %208 : vector<1x128xf32> to vector<16x128xf32>
    %226 = arith.maximumf %207, %225 : vector<16x128xf32>
    %227 = arith.addf %109, %226 : vector<16x128xf32>
    %228 = math.exp %227 : vector<16x128xf32>
    %229 = arith.mulf %228, %224 : vector<16x128xf32>
    %c0_67 = arith.constant 0 : index
    %c0_68 = arith.constant 0 : index
    %c0_69 = arith.constant 0 : index
    %230 = vector.load %arg7[%c0_67, %c0_68, %c0_69] : memref<1x16x128xf32, #tpu.memory_space<vmem>>, vector<1x16x128xf32>
    %231 = vector.shape_cast %230 : vector<1x16x128xf32> to vector<16x128xf32>
    %232 = vector.shape_cast %229 : vector<16x128xf32> to vector<1x16x128xf32>
    tpu.vector_store %arg7[%c0_67, %c0_68, %c0_69], %232 {strides = array<i32>} : memref<1x16x128xf32, #tpu.memory_space<vmem>>, vector<1x16x128xf32>,
    %233 = vector.extract_strided_slice %109 {offsets = [15, 0], sizes = [1, 128], strides = [1, 1]} : vector<16x128xf32> to vector<1x128xf32>
    %c0_70 = arith.constant 0 : index
    %c0_71 = arith.constant 0 : index
    %234 = vector.load %arg8[%c0_70, %c0_71] : memref<1x128xf32, #tpu.memory_space<vmem>>, vector<1x128xf32>
    tpu.vector_store %arg8[%c0_70, %c0_71], %233 {strides = array<i32>} : memref<1x128xf32, #tpu.memory_space<vmem>>, vector<1x128xf32>,
    %235 = vector.extract_strided_slice %226 {offsets = [15, 0], sizes = [1, 128], strides = [1, 1]} : vector<16x128xf32> to vector<1x128xf32>
    %c0_72 = arith.constant 0 : index
    %c0_73 = arith.constant 0 : index
    %236 = vector.load %arg9[%c0_72, %c0_73] : memref<1x128xf32, #tpu.memory_space<vmem>>, vector<1x128xf32>
    tpu.vector_store %arg9[%c0_72, %c0_73], %235 {strides = array<i32>} : memref<1x128xf32, #tpu.memory_space<vmem>>, vector<1x128xf32>,
    %237 = vector.extract_strided_slice %224 {offsets = [15, 0], sizes = [1, 128], strides = [1, 1]} : vector<16x128xf32> to vector<1x128xf32>
    %c0_74 = arith.constant 0 : index
    %c0_75 = arith.constant 0 : index
    %238 = vector.load %arg10[%c0_74, %c0_75] : memref<1x128xf32, #tpu.memory_space<vmem>>, vector<1x128xf32>
    tpu.vector_store %arg10[%c0_74, %c0_75], %237 {strides = array<i32>} : memref<1x128xf32, #tpu.memory_space<vmem>>, vector<1x128xf32>,
    return
  }
  func.func @transform_0(%arg0: i32, %arg1: i32, %arg2: i32) -> (i32, i32, i32) {
    %c0_i32 = arith.constant 0 : i32
    %c0_i32_0 = arith.constant 0 : i32
    return %arg1, %arg2, %c0_i32 : i32, i32, i32
  }
  func.func @transform_1(%arg0: i32, %arg1: i32, %arg2: i32) -> (i32, i32, i32) {
    %c0_i32 = arith.constant 0 : i32
    %c0_i32_0 = arith.constant 0 : i32
    return %arg1, %c0_i32, %arg0 : i32, i32, i32
  }
  func.func @transform_2(%arg0: i32, %arg1: i32, %arg2: i32) -> (i32, i32) {
    %c0_i32 = arith.constant 0 : i32
    %c0_i32_0 = arith.constant 0 : i32
    return %c0_i32, %arg0 : i32, i32
  }
  func.func @transform_3(%arg0: i32, %arg1: i32, %arg2: i32) -> (i32, i32) {
    %c0_i32 = arith.constant 0 : i32
    %c0_i32_0 = arith.constant 0 : i32
    return %c0_i32, %arg0 : i32, i32
  }
  func.func @transform_4(%arg0: i32, %arg1: i32, %arg2: i32) -> (i32, i32, i32) {
    %c0_i32 = arith.constant 0 : i32
    return %arg1, %arg2, %arg0 : i32, i32, i32
  }
}

</mosaic_0001>

<llo_original>
// kernel: tpu_custom_call.1
$region0: #{tpu_custom_call.1}
  #allocation0 [shape = 'u32[]', space=smem, size = 0x4, offset = 0x4, fixed_abs, tag = 'smem constant byte address 0x4 - core index']
  #allocation1 [shape = 'u32[72,128]{1,0:T(1,128)}', space=vmem, size = 0x9000, scoped, tag = 'internal scratch']
  #allocation2 [shape = 'f32[1,128]{1,0:T(1,128)}', space=vmem, size = 0x200, scoped, tag = 'scratch operand']
  #allocation3 [shape = 'f32[1,128]{1,0:T(1,128)}', space=vmem, size = 0x200, scoped, tag = 'scratch operand']
  #allocation4 [shape = 'f32[1,128]{1,0:T(1,128)}', space=vmem, size = 0x200, scoped, tag = 'scratch operand']
  %s0 = inlined_call_operand.hbm [shape: bf16[2,16,32], index: 0, kind: input, shape index: {}]
  %s1 = inlined_call_operand.hbm [shape: f32[2,1,128], index: 1, kind: input, shape index: {}]
  %s2 = inlined_call_operand.hbm [shape: bf16[32,384], index: 2, kind: input, shape index: {}]
  %s3 = inlined_call_operand.hbm [shape: f32[1,384], index: 3, kind: input, shape index: {}]
  %s4 = inlined_call_operand.hbm [shape: f32[2,16,128], index: 4, kind: output, shape index: {}]
  %s5 = sld [smem:[#allocation0]]
  $region69: #{tpu_custom_call.1} parent=0
    _
  %s7 = ssub.s32 1, %s5
  %s8 = scalar_select 0, %s7, %s5
  $region1: #{tpu_custom_call.1} parent=0
    #allocation5 [shape = 'u8[8192]{0}', space=vmem, size = 0x2000, scoped, tag = 'input window, operand 0']
    #allocation6 [shape = 's32[2]{0}', space=sflag, size = 0x8, scoped, tag = 'scoped memory for tpu_custom_call.1']
    #allocation7 [shape = 's32[2]{0}', space=sflag, size = 0x8, scoped, tag = 'scoped memory for tpu_custom_call.1']
    #allocation8 [shape = 'u8[1024]{0}', space=vmem, size = 0x400, scoped, tag = 'input window, operand 1']
    #allocation9 [shape = 's32[2]{0}', space=sflag, size = 0x8, scoped, tag = 'scoped memory for tpu_custom_call.1']
    #allocation10 [shape = 'u8[24576]{0}', space=vmem, size = 0x6000, scoped, tag = 'input window, operand 2, single buffered']
    #allocation11 [shape = 'u8[1536]{0}', space=vmem, size = 0x800, scoped, tag = 'input window, operand 3, single buffered']
    #allocation12 [shape = 's32[1]{0}', space=sflag, size = 0x4, scoped, tag = 'scoped memory for tpu_custom_call.1']
    #allocation13 [shape = 'u8[16384]{0}', space=vmem, size = 0x4000, scoped, tag = 'output window, operand 0']
    %9 = vsyncpa [#allocation6], 0
    %s10 = scalar_lea.sflag [#allocation6], 1
    %11 = vsyncpa %s10, 0
    %12 = vsyncpa [#allocation9], 0
    %s13 = scalar_lea.sflag [#allocation9], 1
    %14 = vsyncpa %s13, 0
    %15 = vsyncpa [#allocation12], 0
    %16 = vsyncpa [#allocation7], 0
    %s17 = scalar_lea.sflag [#allocation7], 1
    %18 = vsyncpa %s17, 0
    loop: start=0, step=1, limit=4
    $region2: #{tpu_custom_call.1} parent=1 // loop_pre_header
      _
    $region3: #{tpu_custom_call.1} parent=1 // loop_header
      %s20 = sphi 0, %s24
      %p21 = scmp.ge.s32.totalorder %s20, 4
      %s27 = sphi 0, %s46
      %s28 = sphi 0, %s42
      %s29 = sphi 0, %s38
      %s30 = sphi 0, %s27
      %s31 = sphi 0, %s28
      %s32 = sphi 0, %s29
      %s33 = sphi 0, %s30
      %s34 = sphi 0, %s31
      %s35 = sphi 0, %s32
      %s51 = sphi 0, %s53
      %s54 = sphi 0, %s51
      %s55 = sphi 0, %s54
      %s71 = sphi 0, %s55
      %s79 = sphi 0, %s81
      %s82 = sphi 0, %s79
      %s83 = sphi 0, %s82
      %s99 = sphi 0, %s83
      %s105 = sphi 0, %s107
      %s108 = sphi 0, %s105
      %s109 = sphi 0, %s108
      %s125 = sphi 0, %s109
      %s131 = sphi 0, %s133
      %s134 = sphi 0, %s131
      %s135 = sphi 0, %s134
      %s151 = sphi 0, %s135
      %s161 = sphi 0, %s163
      %s164 = sphi 0, %s161
      %s165 = sphi 0, %s164
      %s181 = sphi 0, %s165
    $region4: #{tpu_custom_call.1} parent=1 // loop_header_branch
      %23 = sbr.rel (%p21) target = $region8
    $region5: #{tpu_custom_call.1} parent=1 // loop_body
      %s25 = ssub.s32 %s20, 1
      %s26 = ssub.s32 %s20, 2
      %s36 = sadd.s32 1, %s29
      %p37 = scmp.ge.s32.totalorder %s36, 1
      %s38 = scalar_select %p37, 0, %s36
      %s39 = sadd.s32 1, %s28
      %s40 = scalar_select %p37, %s39, %s28
      %p41 = scmp.ge.s32.totalorder %s40, 2
      %s42 = scalar_select %p41, 0, %s40
      %s43 = sadd.s32 1, %s27
      %s44 = scalar_select %p41, %s43, %s27
      %p45 = scmp.ge.s32.totalorder %s44, 1
      %s46 = scalar_select %p45, 0, %s44
      %s47 = ssub.s32 %s28, %s42
      %s48 = ssub.s32 %s29, %s38
      %s49 = sor.u32 %s47, %s48
      %p50 = scmp.eq.s32.totalorder %s49, 0
      %s52 = sadd.s32 %s51, 1
      %s53 = scalar_select %p50, %s51, %s52
      %p56 = pneg %p50
      %p57 = scmp.eq.s32.totalorder %s20, 1
      %p58 = por %p56, %p57
      %p59 = scmp.ne.s32.totalorder %s51, %s54
      %p60 = scmp.eq.s32.totalorder %s20, 0
      %p61 = por %p59, %p60
      %p62 = scmp.ne.s32.totalorder %s51, %s54
      %p63 = scmp.eq.s32.totalorder %s25, 1
      %p64 = por %p62, %p63
      %p65 = scmp.ne.s32.totalorder %s54, %s55
      %p66 = scmp.eq.s32.totalorder %s25, 0
      %p67 = por %p65, %p66
      %p68 = scmp.ne.s32.totalorder %s54, %s55
      %p69 = scmp.eq.s32.totalorder %s26, 1
      %p70 = por %p68, %p69
      %p72 = scmp.ne.s32.totalorder %s55, %s71
      %p73 = scmp.eq.s32.totalorder %s26, 0
      %p74 = por %p72, %p73
      %s75 = ssub.s32 %s28, %s42
      %s76 = ssub.s32 %s27, %s46
      %s77 = sor.u32 %s75, %s76
      %p78 = scmp.eq.s32.totalorder %s77, 0
      %s80 = sadd.s32 %s79, 1
      %s81 = scalar_select %p78, %s79, %s80
      %p84 = pneg %p78
      %p85 = scmp.eq.s32.totalorder %s20, 1
      %p86 = por %p84, %p85
      %p87 = scmp.ne.s32.totalorder %s79, %s82
      %p88 = scmp.eq.s32.totalorder %s20, 0
      %p89 = por %p87, %p88
      %p90 = scmp.ne.s32.totalorder %s79, %s82
      %p91 = scmp.eq.s32.totalorder %s25, 1
      %p92 = por %p90, %p91
      %p93 = scmp.ne.s32.totalorder %s82, %s83
      %p94 = scmp.eq.s32.totalorder %s25, 0
      %p95 = por %p93, %p94
      %p96 = scmp.ne.s32.totalorder %s82, %s83
      %p97 = scmp.eq.s32.totalorder %s26, 1
      %p98 = por %p96, %p97
      %p100 = scmp.ne.s32.totalorder %s83, %s99
      %p101 = scmp.eq.s32.totalorder %s26, 0
      %p102 = por %p100, %p101
      %s103 = ssub.s32 %s27, %s46
      %p104 = scmp.eq.s32.totalorder %s103, 0
      %s106 = sadd.s32 %s105, 1
      %s107 = scalar_select %p104, %s105, %s106
      %p110 = pneg %p104
      %p111 = scmp.eq.s32.totalorder %s20, 1
      %p112 = por %p110, %p111
      %p113 = scmp.ne.s32.totalorder %s105, %s108
      %p114 = scmp.eq.s32.totalorder %s20, 0
      %p115 = por %p113, %p114
      %p116 = scmp.ne.s32.totalorder %s105, %s108
      %p117 = scmp.eq.s32.totalorder %s25, 1
      %p118 = por %p116, %p117
      %p119 = scmp.ne.s32.totalorder %s108, %s109
      %p120 = scmp.eq.s32.totalorder %s25, 0
      %p121 = por %p119, %p120
      %p122 = scmp.ne.s32.totalorder %s108, %s109
      %p123 = scmp.eq.s32.totalorder %s26, 1
      %p124 = por %p122, %p123
      %p126 = scmp.ne.s32.totalorder %s109, %s125
      %p127 = scmp.eq.s32.totalorder %s26, 0
      %p128 = por %p126, %p127
      %s129 = ssub.s32 %s27, %s46
      %p130 = scmp.eq.s32.totalorder %s129, 0
      %s132 = sadd.s32 %s131, 1
      %s133 = scalar_select %p130, %s131, %s132
      %p136 = pneg %p130
      %p137 = scmp.eq.s32.totalorder %s20, 1
      %p138 = por %p136, %p137
      %p139 = scmp.ne.s32.totalorder %s131, %s134
      %p140 = scmp.eq.s32.totalorder %s20, 0
      %p141 = por %p139, %p140
      %p142 = scmp.ne.s32.totalorder %s131, %s134
      %p143 = scmp.eq.s32.totalorder %s25, 1
      %p144 = por %p142, %p143
      %p145 = scmp.ne.s32.totalorder %s134, %s135
      %p146 = scmp.eq.s32.totalorder %s25, 0
      %p147 = por %p145, %p146
      %p148 = scmp.ne.s32.totalorder %s134, %s135
      %p149 = scmp.eq.s32.totalorder %s26, 1
      %p150 = por %p148, %p149
      %p152 = scmp.ne.s32.totalorder %s135, %s151
      %p153 = scmp.eq.s32.totalorder %s26, 0
      %p154 = por %p152, %p153
      %s155 = ssub.s32 %s28, %s42
      %s156 = ssub.s32 %s29, %s38
      %s157 = sor.u32 %s155, %s156
      %s158 = ssub.s32 %s27, %s46
      %s159 = sor.u32 %s157, %s158
      %p160 = scmp.eq.s32.totalorder %s159, 0
      %s162 = sadd.s32 %s161, 1
      %s163 = scalar_select %p160, %s161, %s162
      %p166 = pneg %p160
      %p167 = scmp.eq.s32.totalorder %s20, 1
      %p168 = por %p166, %p167
      %p169 = scmp.ne.s32.totalorder %s161, %s164
      %p170 = scmp.eq.s32.totalorder %s20, 0
      %p171 = por %p169, %p170
      %p172 = scmp.ne.s32.totalorder %s161, %s164
      %p173 = scmp.eq.s32.totalorder %s25, 1
      %p174 = por %p172, %p173
      %p175 = scmp.ne.s32.totalorder %s164, %s165
      %p176 = scmp.eq.s32.totalorder %s25, 0
      %p177 = por %p175, %p176
      %p178 = scmp.ne.s32.totalorder %s164, %s165
      %p179 = scmp.eq.s32.totalorder %s26, 1
      %p180 = por %p178, %p179
      %p182 = scmp.ne.s32.totalorder %s165, %s181
      %p183 = scmp.eq.s32.totalorder %s26, 0
      %p184 = por %p182, %p183
      %p185 = scmp.le.s32.totalorder 1, %s20
      %p186 = scmp.lt.s32.totalorder %s20, 3
      %p187 = pnand %p185, %p186
      %p188 = pneg %p187
      // Predicated region
      $region9: #{tpu_custom_call.1} parent=5 // pred_check
        _
      $region10: #{tpu_custom_call.1} parent=5 // pred_check_branch
        %190 = sbr.rel (%p187) target = $region12
      $region11: #{tpu_custom_call.1} parent=5 // pred_region
        %s191 = ssub.s32 %s20, 1
        // Predicated region
        $region13: #{tpu_custom_call.1} parent=11 // pred_check
          %p192 = pneg %p121
        $region14: #{tpu_custom_call.1} parent=11 // pred_check_branch
          %194 = sbr.rel (%p192) target = $region16
        $region15: #{tpu_custom_call.1} parent=11 // pred_region
          %s195 = smul.u32 3, %s30
          %197 = vsyncadd [#allocation9], 0
          %s198 = smul.addr %s195, 4
          %s199 = scalar_lea.hbm %s2, %s198
          %s200 = sshll.u32 %s199, 4
          %s201 = int_to_ptr.hbm [resolvable:$true] %s200
          %s202 = sshll.u32 [#allocation10], 4
          %s203 = int_to_ptr.vmem [resolvable:$true] %s202
          %208 = dma.hbm_to_vmem [thread:$0]  %s201, 768, %s203, [#allocation9], 192, 192, 12
        $region16: #{tpu_custom_call.1} parent=11 // pred_fallthru
          _
        // Predicated region
        $region17: #{tpu_custom_call.1} parent=11 // pred_check
          %p209 = pneg %p147
        $region18: #{tpu_custom_call.1} parent=11 // pred_check_branch
          %211 = sbr.rel (%p209) target = $region20
        $region19: #{tpu_custom_call.1} parent=11 // pred_region
          %s212 = smul.u32 3, %s30
          %214 = vsyncadd [#allocation12], 0
          %s215 = scalar_lea.hbm %s3, %s212
          %s217 = sshll.u32 %s215, 4
          %s218 = int_to_ptr.hbm [resolvable:$true] %s217
          %s219 = sshll.u32 [#allocation11], 4
          %s220 = int_to_ptr.vmem [resolvable:$true] %s219
          %222 = dma.hbm_to_vmem [thread:$0]  %s218, 48, %s220, [#allocation12]
        $region20: #{tpu_custom_call.1} parent=11 // pred_fallthru
          _
      $region12: #{tpu_custom_call.1} parent=5 // pred_fallthru
        _
      %p223 = scmp.lt.s32.totalorder %s20, 2
      // Predicated region
      $region21: #{tpu_custom_call.1} parent=5 // pred_check
        %p224 = pneg %p223
      $region22: #{tpu_custom_call.1} parent=5 // pred_check_branch
        %226 = sbr.rel (%p224) target = $region24
      $region23: #{tpu_custom_call.1} parent=5 // pred_region
        // Predicated region
        $region25: #{tpu_custom_call.1} parent=23 // pred_check
          %p227 = pneg %p61
        $region26: #{tpu_custom_call.1} parent=23 // pred_check_branch
          %229 = sbr.rel (%p227) target = $region28
        $region27: #{tpu_custom_call.1} parent=23 // pred_region
          %s230 = sand.u32 %s51, 1
          %s231 = scalar_lea.sflag [#allocation6], %s230
          %s232 = sand.u32 %s51, 1
          %s233 = smul.addr %s232, 8
          %s234 = scalar_lea.vmem [#allocation5], %s233
          %s235 = smul.u32 2, %s29
          %237 = vsyncadd %s231, 0
          %s238 = smul.addr %s28, 2
          %s239 = sadd.s32 %s235, %s238
          %s240 = smul.addr %s239, 4
          %s241 = scalar_lea.hbm %s0, %s240
          %s242 = sshll.u32 %s241, 4
          %s243 = int_to_ptr.hbm [resolvable:$true] %s242
          %s244 = sshll.u32 %s234, 4
          %s245 = int_to_ptr.vmem [resolvable:$true] %s244
          %250 = dma.hbm_to_vmem [thread:$0]  %s243, 128, %s245, %s231, 64, 64, 4
        $region28: #{tpu_custom_call.1} parent=23 // pred_fallthru
          _
        // Predicated region
        $region29: #{tpu_custom_call.1} parent=23 // pred_check
          %p251 = pneg %p89
        $region30: #{tpu_custom_call.1} parent=23 // pred_check_branch
          %253 = sbr.rel (%p251) target = $region32
        $region31: #{tpu_custom_call.1} parent=23 // pred_region
          %s254 = sand.u32 %s20, 1
          %s255 = scalar_lea.sflag [#allocation9], %s254
          %s256 = sand.u32 %s79, 1
          %s257 = scalar_lea.vmem [#allocation8], %s256
          %259 = vsyncadd %s255, 0
          %s260 = sadd.s32 %s27, %s28
          %s261 = scalar_lea.hbm %s1, %s260
          %s263 = sshll.u32 %s261, 4
          %s264 = int_to_ptr.hbm [resolvable:$true] %s263
          %s265 = sshll.u32 %s257, 4
          %s266 = int_to_ptr.vmem [resolvable:$true] %s265
          %268 = dma.hbm_to_vmem [thread:$0]  %s264, 16, %s266, %s255
        $region32: #{tpu_custom_call.1} parent=23 // pred_fallthru
          _
      $region24: #{tpu_custom_call.1} parent=5 // pred_fallthru
        _
      %p269 = scmp.le.s32.totalorder 1, %s20
      %p270 = scmp.lt.s32.totalorder %s20, 3
      %p271 = pnand %p269, %p270
      %p272 = pneg %p271
      // Predicated region
      $region33: #{tpu_custom_call.1} parent=5 // pred_check
        _
      $region34: #{tpu_custom_call.1} parent=5 // pred_check_branch
        %274 = sbr.rel (%p271) target = $region36
      $region35: #{tpu_custom_call.1} parent=5 // pred_region
        %s275 = ssub.s32 %s20, 1
        %s276 = sand.u32 %s54, 1
        %s277 = scalar_lea.sflag [#allocation6], %s276
        %s278 = sand.u32 %s54, 1
        %s279 = smul.addr %s278, 8
        %s280 = scalar_lea.vmem [#allocation5], %s279
        // Predicated region
        $region37: #{tpu_custom_call.1} parent=35 // pred_check
          %p281 = pneg %p67
        $region38: #{tpu_custom_call.1} parent=35 // pred_check_branch
          %283 = sbr.rel (%p281) target = $region40
        $region39: #{tpu_custom_call.1} parent=35 // pred_region
          %285 = dma.done %s277, 128
        $region40: #{tpu_custom_call.1} parent=35 // pred_fallthru
          _
        %s286 = sand.u32 %s25, 1
        %s287 = scalar_lea.sflag [#allocation9], %s286
        %s288 = sand.u32 %s82, 1
        %s289 = scalar_lea.vmem [#allocation8], %s288
        // Predicated region
        $region41: #{tpu_custom_call.1} parent=35 // pred_check
          %p290 = pneg %p95
        $region42: #{tpu_custom_call.1} parent=35 // pred_check_branch
          %292 = sbr.rel (%p290) target = $region44
        $region43: #{tpu_custom_call.1} parent=35 // pred_region
          %294 = dma.done %s287, 16
        $region44: #{tpu_custom_call.1} parent=35 // pred_fallthru
          _
        // Predicated region
        $region45: #{tpu_custom_call.1} parent=35 // pred_check
          %p295 = pneg %p121
        $region46: #{tpu_custom_call.1} parent=35 // pred_check_branch
          %297 = sbr.rel (%p295) target = $region48
        $region47: #{tpu_custom_call.1} parent=35 // pred_region
          %299 = dma.done [#allocation9], 768
        $region48: #{tpu_custom_call.1} parent=35 // pred_fallthru
          _
        // Predicated region
        $region49: #{tpu_custom_call.1} parent=35 // pred_check
          %p300 = pneg %p147
        $region50: #{tpu_custom_call.1} parent=35 // pred_check_branch
          %302 = sbr.rel (%p300) target = $region52
        $region51: #{tpu_custom_call.1} parent=35 // pred_region
          %304 = dma.done [#allocation12], 48
        $region52: #{tpu_custom_call.1} parent=35 // pred_fallthru
          _
        %s305 = sand.u32 %s54, 1
        %s306 = scalar_lea.sflag [#allocation6], %s305
        %s307 = sand.u32 %s54, 1
        %s308 = smul.addr %s307, 8
        %s309 = scalar_lea.vmem [#allocation5], %s308
        %p310 = pneg %p67
        %p311 = pneg %p64
        %s312 = sand.u32 %s25, 1
        %s313 = scalar_lea.sflag [#allocation9], %s312
        %s314 = sand.u32 %s82, 1
        %s315 = scalar_lea.vmem [#allocation8], %s314
        %p316 = pneg %p95
        %p317 = pneg %p92
        %p318 = pneg %p121
        %p319 = pneg %p118
        %p320 = pneg %p147
        %p321 = pneg %p144
        %p322 = pneg %p177
        %p323 = pneg %p174
        %s324 = sand.u32 %s164, 1
        %s325 = scalar_lea.sflag [#allocation7], %s324
        %s326 = sand.u32 %s164, 1
        %s327 = smul.addr %s326, 16
        %s328 = scalar_lea.vmem [#allocation13], %s327
        %s329 = smul.u32 2, %s32
        %s330 = smul.u32 3, %s30
        %s331 = smul.u32 3, %s30
        %s332 = smul.u32 2, %s32
        %p334 = scmp.eq.s32.totalorder %s32, 0
        // Predicated region
        $region53: #{tpu_custom_call.1} parent=35 // pred_check
          %p335 = pneg %p334
        $region54: #{tpu_custom_call.1} parent=35 // pred_check_branch
          %337 = sbr.rel (%p335) target = $region56
        $region55: #{tpu_custom_call.1} parent=35 // pred_region
          %338 = vst [vmem:[#allocation2] sm:$0x1] 0.0
          %v339 = vld [vmem:[%s289] sm:$0x1]
          %340 = vst [vmem:[#allocation3] sm:$0x1] %v339
          %341 = vst [vmem:[#allocation4] sm:$0x1] 1.0
        $region56: #{tpu_custom_call.1} parent=35 // pred_fallthru
          _
        %v342 = vld [vmem:[%s280] sm:$0xf]
        %v343 = vld [vmem:[%s280 + $0x4] sm:$0xf]
        %v344 = vld [vmem:[#allocation10] sm:$0xff]
        %v345 = vld [vmem:[#allocation10 + $0x8] sm:$0xf]
        %v346 = vld [vmem:[#allocation10 + $0xc] sm:$0xff]
        %v347 = vld [vmem:[#allocation10 + $0x14] sm:$0xf]
        %v348 = vld [vmem:[#allocation10 + $0x18] sm:$0xff]
        %v349 = vld [vmem:[#allocation10 + $0x20] sm:$0xf]
        %v350 = vld [vmem:[#allocation10 + $0x24] sm:$0xff]
        %v351 = vld [vmem:[#allocation10 + $0x2c] sm:$0xf]
        %v352 = vld [vmem:[#allocation11] sm:$0x7]
        %v354 = vperm.slane %v352, 0
        %v355 = vperm.slane %v352, 1
        %v356 = vperm.slane %v352, 2
        %v362 = vunpack.c.l.b16 %v342
        %v363 = vunpack.c.l.b16 %v343
        %v364 = vpack.c.b16 %v363, %v362
        %v373 = vunpack.c.l.b16 %v344
        %v374 = vunpack.c.h.b16 %v344
        %v375 = vunpack.c.l.b16 %v345
        %v376 = vunpack.c.l.b16 %v346
        %v377 = vunpack.c.h.b16 %v346
        %v378 = vunpack.c.l.b16 %v347
        %v379 = vunpack.c.l.b16 %v348
        %v380 = vunpack.c.h.b16 %v348
        %v381 = vunpack.c.l.b16 %v349
        %v382 = vunpack.c.l.b16 %v350
        %v383 = vunpack.c.h.b16 %v350
        %v384 = vunpack.c.l.b16 %v351
        %v385 = vpack.c.b16 %v376, %v373
        %v386 = vpack.c.b16 %v377, %v374
        %v387 = vpack.c.b16 %v378, %v375
        %v388 = vpack.c.b16 %v382, %v379
        %v389 = vpack.c.b16 %v383, %v380
        %v390 = vpack.c.b16 %v384, %v381
        %vm397 = vcmask 261120
        %v399 = vsel %vm397, %v364, 0
        %401 = vmatpush.bf16.msra.mxu0 0
        %402 = vmatpush.bf16.msra.mxu0 0
        %403 = vmatpush.bf16.msra.mxu0 0
        %404 = vmatpush.bf16.msra.mxu0 0
        %405 = vmatpush.bf16.msra.mxu0 0
        %406 = vmatpush.bf16.msra.mxu0 0
        %407 = vmatpush.bf16.msra.mxu0 %v388
        %408 = vmatpush.bf16.msra.mxu0 %v385
        %409 = vmatmul.bf16.gmra.mxu0 %v399
        %v410 = vpop.f32.mrf.mxu0
        %v411 = vadd.f32 %v354, %v410
        %v412 = vpop.f32.mrf.mxu0
        %v413 = vadd.f32 %v354, %v412
        %414 = vdwg.mxu0
        %415 = vmatpush.bf16.msra.mxu0 0
        %416 = vmatpush.bf16.msra.mxu0 0
        %417 = vmatpush.bf16.msra.mxu0 0
        %418 = vmatpush.bf16.msra.mxu0 0
        %419 = vmatpush.bf16.msra.mxu0 0
        %420 = vmatpush.bf16.msra.mxu0 0
        %421 = vmatpush.bf16.msra.mxu0 %v389
        %422 = vmatpush.bf16.msra.mxu0 %v386
        %423 = vmatmul.bf16.gmra.mxu0 %v399
        %v424 = vpop.f32.mrf.mxu0
        %v425 = vadd.f32 %v355, %v424
        %v426 = vpop.f32.mrf.mxu0
        %v427 = vadd.f32 %v355, %v426
        %428 = vdwg.mxu0
        %429 = vmatpush.bf16.msra.mxu0 0
        %430 = vmatpush.bf16.msra.mxu0 0
        %431 = vmatpush.bf16.msra.mxu0 0
        %432 = vmatpush.bf16.msra.mxu0 0
        %433 = vmatpush.bf16.msra.mxu0 0
        %434 = vmatpush.bf16.msra.mxu0 0
        %435 = vmatpush.bf16.msra.mxu0 %v390
        %436 = vmatpush.bf16.msra.mxu0 %v387
        %437 = vmatmul.bf16.gmra.mxu0 %v399
        %v438 = vpop.f32.mrf.mxu0
        %v439 = vadd.f32 %v356, %v438
        %v440 = vpop.f32.mrf.mxu0
        %v441 = vadd.f32 %v356, %v440
        %442 = vdwg.mxu0
        %v443 = vlaneseq
        %v444 = vshrl.u32 %v443, 7
        %v445 = vadd.s32 %v444, 8
        %v446 = vsub.f32 0.0, %v411
        %v447 = vsub.f32 0.0, %v413
        %v448 = vmax.f32 %v446, 0.0
        %v449 = vmax.f32 %v447, 0.0
        %v450 = vand.u32 2147483647, %v446
        %v451 = vand.u32 2147483647, %v447
        %v452 = vsub.f32 0.0, %v450
        %v453 = vsub.f32 0.0, %v451
        %v454 = vmul.f32 %v452, 1.442695
        %v455 = vpow.pop %v454
        %v456 = vmul.f32 %v453, 1.442695
        %v457 = vpow.pop %v456
        %v458 = vadd.f32 %v455, 1.0
        %v459 = vadd.f32 %v457, 1.0
        %v460 = vlog2.pop %v458
        %v461 = vmul.f32 %v460, 0.6931472
        %v462 = vlog2.pop %v459
        %v463 = vmul.f32 %v462, 0.6931472
        %v464 = vadd.f32 %v448, %v461
        %v465 = vadd.f32 %v449, %v463
        %v466 = vsub.f32 0.0, %v425
        %v467 = vsub.f32 0.0, %v427
        %v468 = vmax.f32 %v466, 0.0
        %v469 = vmax.f32 %v467, 0.0
        %v470 = vand.u32 2147483647, %v466
        %v471 = vand.u32 2147483647, %v467
        %v472 = vsub.f32 0.0, %v470
        %v473 = vsub.f32 0.0, %v471
        %v474 = vmul.f32 %v472, 1.442695
        %v475 = vpow.pop %v474
        %v476 = vmul.f32 %v473, 1.442695
        %v477 = vpow.pop %v476
        %v478 = vadd.f32 %v475, 1.0
        %v479 = vadd.f32 %v477, 1.0
        %v480 = vlog2.pop %v478
        %v481 = vmul.f32 %v480, 0.6931472
        %v482 = vlog2.pop %v479
        %v483 = vmul.f32 %v482, 0.6931472
        %v484 = vadd.f32 %v468, %v481
        %v485 = vadd.f32 %v469, %v483
        %v486 = vsub.f32 %v464, %v484
        %v487 = vsub.f32 %v465, %v485
        %v488 = vmax.f32 %v486, 0.0
        %v489 = vmax.f32 %v487, 0.0
        %v490 = vand.u32 2147483647, %v486
        %v491 = vand.u32 2147483647, %v487
        %v492 = vsub.f32 0.0, %v490
        %v493 = vsub.f32 0.0, %v491
        %v494 = vmul.f32 %v492, 1.442695
        %v495 = vpow.pop %v494
        %v496 = vmul.f32 %v493, 1.442695
        %v497 = vpow.pop %v496
        %v498 = vadd.f32 %v495, 1.0
        %v499 = vadd.f32 %v497, 1.0
        %v500 = vlog2.pop %v498
        %v501 = vmul.f32 %v500, 0.6931472
        %v502 = vlog2.pop %v499
        %v503 = vmul.f32 %v502, 0.6931472
        %v504 = vadd.f32 %v488, %v501
        %v505 = vadd.f32 %v489, %v503
        %v506 = vsub.f32 0.0, %v504
        %v507 = vsub.f32 0.0, %v505
        %v508 = vadd.f32 %v486, %v506
        %v509 = vadd.f32 %v487, %v507
        %vm510 = vcmp.ge.f32.partialorder %v439, 0.0
        %vm511 = vcmp.ge.f32.partialorder %v441, 0.0
        %v512 = vmax.f32 %v439, 0.0
        %v513 = vmax.f32 %v441, 0.0
        %v514 = vadd.f32 %v512, 0.5
        %v515 = vadd.f32 %v513, 0.5
        %v516 = vlog2.pop %v514
        %v517 = vmul.f32 %v516, 0.6931472
        %v518 = vlog2.pop %v515
        %v519 = vmul.f32 %v518, 0.6931472
        %v520 = vsub.f32 0.0, %v439
        %v521 = vsub.f32 0.0, %v441
        %v522 = vmax.f32 %v520, 0.0
        %v523 = vmax.f32 %v521, 0.0
        %v524 = vand.u32 2147483647, %v520
        %v525 = vand.u32 2147483647, %v521
        %v526 = vsub.f32 0.0, %v524
        %v527 = vsub.f32 0.0, %v525
        %v528 = vmul.f32 %v526, 1.442695
        %v529 = vpow.pop %v528
        %v530 = vmul.f32 %v527, 1.442695
        %v531 = vpow.pop %v530
        %v532 = vadd.f32 %v529, 1.0
        %v533 = vadd.f32 %v531, 1.0
        %v534 = vlog2.pop %v532
        %v535 = vmul.f32 %v534, 0.6931472
        %v536 = vlog2.pop %v533
        %v537 = vmul.f32 %v536, 0.6931472
        %v538 = vadd.f32 %v522, %v535
        %v539 = vadd.f32 %v523, %v537
        %v540 = vsub.f32 0.0, %v538
        %v541 = vsub.f32 0.0, %v539
        %v542 = vsel %vm510, %v517, %v540
        %v543 = vsel %vm511, %v519, %v541
        %v544 = vadd.f32 %v508, %v542
        %v545 = vadd.f32 %v509, %v543
        %vm546 = vcmp.ge.s32.totalorder %v444, 1
        %vm547 = vcmp.ge.s32.totalorder %v445, 1
        %v548 = vrot.slane %v506, 7
        %v549 = vrot.slane %v507, 7
        %vm550 = vcmp.lt.s32.totalorder %v444, 1
        %v551 = vsel %vm550, %v548, %v549
        %v552 = vsel %vm550, %v549, %v548
        %v553 = vsel %vm546, 1, 0
        %v554 = vsel %vm547, 1, 0
        %vm555 = vcmp.eq.s32.totalorder %v553, 1
        %vm556 = vcmp.eq.s32.totalorder %v554, 1
        %v557 = vsel %vm555, %v552, 0.0
        %v558 = vsel %vm556, %v551, 0.0
        %v559 = vadd.f32 %v506, %v557
        %v560 = vadd.f32 %v507, %v558
        %vm561 = vcmp.ge.s32.totalorder %v444, 2
        %vm562 = vcmp.ge.s32.totalorder %v445, 2
        %v563 = vrot.slane %v559, 6
        %v564 = vrot.slane %v560, 6
        %vm565 = vcmp.lt.s32.totalorder %v444, 2
        %v566 = vsel %vm565, %v563, %v564
        %v567 = vsel %vm565, %v564, %v563
        %v568 = vsel %vm561, 1, 0
        %v569 = vsel %vm562, 1, 0
        %vm570 = vcmp.eq.s32.totalorder %v568, 1
        %vm571 = vcmp.eq.s32.totalorder %v569, 1
        %v572 = vsel %vm570, %v567, 0.0
        %v573 = vsel %vm571, %v566, 0.0
        %v574 = vadd.f32 %v559, %v572
        %v575 = vadd.f32 %v560, %v573
        %vm576 = vcmp.ge.s32.totalorder %v444, 4
        %vm577 = vcmp.ge.s32.totalorder %v445, 4
        %v578 = vrot.slane %v574, 4
        %v579 = vrot.slane %v575, 4
        %vm580 = vcmp.lt.s32.totalorder %v444, 4
        %v581 = vsel %vm580, %v578, %v579
        %v582 = vsel %vm580, %v579, %v578
        %v583 = vsel %vm576, 1, 0
        %v584 = vsel %vm577, 1, 0
        %vm585 = vcmp.eq.s32.totalorder %v583, 1
        %vm586 = vcmp.eq.s32.totalorder %v584, 1
        %v587 = vsel %vm585, %v582, 0.0
        %v588 = vsel %vm586, %v581, 0.0
        %v589 = vadd.f32 %v574, %v587
        %v590 = vadd.f32 %v575, %v588
        %vm591 = vcmp.ge.s32.totalorder %v444, 8
        %vm592 = vcmp.ge.s32.totalorder %v445, 8
        %v593 = vsel %vm591, 1, 0
        %v594 = vsel %vm592, 1, 0
        %vm595 = vcmp.eq.s32.totalorder %v593, 1
        %vm596 = vcmp.eq.s32.totalorder %v594, 1
        %v597 = vsel %vm595, %v590, 0.0
        %v598 = vsel %vm596, %v589, 0.0
        %v599 = vadd.f32 %v589, %v597
        %v600 = vadd.f32 %v590, %v598
        %v601 = vld [vmem:[#allocation2] sm:$0x1]
        %v603 = vperm.slane %v601, 0
        %v605 = vadd.f32 %v603, %v599
        %v606 = vadd.f32 %v603, %v600
        %v607 = vsub.f32 %v544, %v605
        %v608 = vsub.f32 %v545, %v606
        %v609 = vrot.slane %v607, 7
        %v610 = vrot.slane %v608, 7
        %v611 = vsel %vm550, %v609, %v610
        %v612 = vsel %vm550, %v610, %v609
        %v613 = vsel %vm555, %v612, -1e+30
        %v614 = vsel %vm556, %v611, -1e+30
        %v615 = vsel %vm555, 1.0, 0.0
        %v616 = vsel %vm556, 1.0, 0.0
        %v617 = vsub.f32 %v607, %v613
        %v618 = vsub.f32 %v608, %v614
        %v619 = vand.u32 2147483647, %v617
        %v620 = vand.u32 2147483647, %v618
        %v621 = vsub.f32 0.0, %v619
        %v622 = vsub.f32 0.0, %v620
        %v623 = vmul.f32 %v621, 1.442695
        %v624 = vpow.pop %v623
        %v625 = vmul.f32 %v622, 1.442695
        %v626 = vpow.pop %v625
        %vm627 = vcmp.ge.f32.partialorder %v607, %v613
        %vm628 = vcmp.ge.f32.partialorder %v608, %v614
        %v629 = vmul.f32 %v624, %v615
        %v630 = vmul.f32 %v626, %v616
        %v631 = vadd.f32 %v629, 1.0
        %v632 = vadd.f32 %v630, 1.0
        %v633 = vadd.f32 %v624, %v615
        %v634 = vadd.f32 %v626, %v616
        %v635 = vsel %vm627, %v631, %v633
        %v636 = vsel %vm628, %v632, %v634
        %v637 = vmax.f32 %v607, %v613
        %v638 = vmax.f32 %v608, %v614
        %v639 = vrot.slane %v637, 6
        %v640 = vrot.slane %v638, 6
        %v641 = vsel %vm565, %v639, %v640
        %v642 = vsel %vm565, %v640, %v639
        %v643 = vsel %vm570, %v642, -1e+30
        %v644 = vsel %vm571, %v641, -1e+30
        %v645 = vrot.slane %v635, 6
        %v646 = vrot.slane %v636, 6
        %v647 = vsel %vm565, %v645, %v646
        %v648 = vsel %vm565, %v646, %v645
        %v649 = vsel %vm570, %v648, 0.0
        %v650 = vsel %vm571, %v647, 0.0
        %v651 = vsub.f32 %v637, %v643
        %v652 = vsub.f32 %v638, %v644
        %v653 = vand.u32 2147483647, %v651
        %v654 = vand.u32 2147483647, %v652
        %v655 = vsub.f32 0.0, %v653
        %v656 = vsub.f32 0.0, %v654
        %v657 = vmul.f32 %v655, 1.442695
        %v658 = vpow.pop %v657
        %v659 = vmul.f32 %v656, 1.442695
        %v660 = vpow.pop %v659
        %vm661 = vcmp.ge.f32.partialorder %v637, %v643
        %vm662 = vcmp.ge.f32.partialorder %v638, %v644
        %v663 = vmul.f32 %v658, %v649
        %v664 = vmul.f32 %v660, %v650
        %v665 = vadd.f32 %v635, %v663
        %v666 = vadd.f32 %v636, %v664
        %v667 = vmul.f32 %v658, %v635
        %v668 = vmul.f32 %v660, %v636
        %v669 = vadd.f32 %v667, %v649
        %v670 = vadd.f32 %v668, %v650
        %v671 = vsel %vm661, %v665, %v669
        %v672 = vsel %vm662, %v666, %v670
        %v673 = vmax.f32 %v637, %v643
        %v674 = vmax.f32 %v638, %v644
        %v675 = vrot.slane %v673, 4
        %v676 = vrot.slane %v674, 4
        %v677 = vsel %vm580, %v675, %v676
        %v678 = vsel %vm580, %v676, %v675
        %v679 = vsel %vm585, %v678, -1e+30
        %v680 = vsel %vm586, %v677, -1e+30
        %v681 = vrot.slane %v671, 4
        %v682 = vrot.slane %v672, 4
        %v683 = vsel %vm580, %v681, %v682
        %v684 = vsel %vm580, %v682, %v681
        %v685 = vsel %vm585, %v684, 0.0
        %v686 = vsel %vm586, %v683, 0.0
        %v687 = vsub.f32 %v673, %v679
        %v688 = vsub.f32 %v674, %v680
        %v689 = vand.u32 2147483647, %v687
        %v690 = vand.u32 2147483647, %v688
        %v691 = vsub.f32 0.0, %v689
        %v692 = vsub.f32 0.0, %v690
        %v693 = vmul.f32 %v691, 1.442695
        %v694 = vpow.pop %v693
        %v695 = vmul.f32 %v692, 1.442695
        %v696 = vpow.pop %v695
        %vm697 = vcmp.ge.f32.partialorder %v673, %v679
        %vm698 = vcmp.ge.f32.partialorder %v674, %v680
        %v699 = vmul.f32 %v694, %v685
        %v700 = vmul.f32 %v696, %v686
        %v701 = vadd.f32 %v671, %v699
        %v702 = vadd.f32 %v672, %v700
        %v703 = vmul.f32 %v694, %v671
        %v704 = vmul.f32 %v696, %v672
        %v705 = vadd.f32 %v703, %v685
        %v706 = vadd.f32 %v704, %v686
        %v707 = vsel %vm697, %v701, %v705
        %v708 = vsel %vm698, %v702, %v706
        %v709 = vmax.f32 %v673, %v679
        %v710 = vmax.f32 %v674, %v680
        %v711 = vsel %vm595, %v710, -1e+30
        %v712 = vsel %vm596, %v709, -1e+30
        %v713 = vsel %vm595, %v708, 0.0
        %v714 = vsel %vm596, %v707, 0.0
        %v715 = vsub.f32 %v709, %v711
        %v716 = vsub.f32 %v710, %v712
        %v717 = vand.u32 2147483647, %v715
        %v718 = vand.u32 2147483647, %v716
        %v719 = vsub.f32 0.0, %v717
        %v720 = vsub.f32 0.0, %v718
        %v721 = vmul.f32 %v719, 1.442695
        %v722 = vpow.pop %v721
        %v723 = vmul.f32 %v720, 1.442695
        %v724 = vpow.pop %v723
        %vm725 = vcmp.ge.f32.partialorder %v709, %v711
        %vm726 = vcmp.ge.f32.partialorder %v710, %v712
        %v727 = vmul.f32 %v722, %v713
        %v728 = vmul.f32 %v724, %v714
        %v729 = vadd.f32 %v707, %v727
        %v730 = vadd.f32 %v708, %v728
        %v731 = vmul.f32 %v722, %v707
        %v732 = vmul.f32 %v724, %v708
        %v733 = vadd.f32 %v731, %v713
        %v734 = vadd.f32 %v732, %v714
        %v735 = vsel %vm725, %v729, %v733
        %v736 = vsel %vm726, %v730, %v734
        %v737 = vmax.f32 %v709, %v711
        %v738 = vmax.f32 %v710, %v712
        %v739 = vld [vmem:[#allocation3] sm:$0x1]
        %v740 = vld [vmem:[#allocation4] sm:$0x1]
        %v742 = vperm.slane %v739, 0
        %v744 = vsub.f32 %v737, %v742
        %v745 = vsub.f32 %v738, %v742
        %v746 = vand.u32 2147483647, %v744
        %v747 = vand.u32 2147483647, %v745
        %v748 = vsub.f32 0.0, %v746
        %v749 = vsub.f32 0.0, %v747
        %v750 = vmul.f32 %v748, 1.442695
        %v751 = vpow.pop %v750
        %v752 = vmul.f32 %v749, 1.442695
        %v753 = vpow.pop %v752
        %vm754 = vcmp.ge.f32.partialorder %v737, %v742
        %vm755 = vcmp.ge.f32.partialorder %v738, %v742
        %v757 = vperm.slane %v740, 0
        %v759 = vmul.f32 %v751, %v757
        %v760 = vmul.f32 %v753, %v757
        %v761 = vadd.f32 %v735, %v759
        %v762 = vadd.f32 %v736, %v760
        %v763 = vmul.f32 %v751, %v735
        %v764 = vmul.f32 %v753, %v736
        %v765 = vadd.f32 %v763, %v757
        %v766 = vadd.f32 %v764, %v757
        %v767 = vsel %vm754, %v761, %v765
        %v768 = vsel %vm755, %v762, %v766
        %v769 = vmax.f32 %v737, %v742
        %v770 = vmax.f32 %v738, %v742
        %v771 = vadd.f32 %v605, %v769
        %v772 = vadd.f32 %v606, %v770
        %v773 = vmul.f32 %v771, 1.442695
        %v774 = vpow.pop %v773
        %v775 = vmul.f32 %v772, 1.442695
        %v776 = vpow.pop %v775
        %v777 = vmul.f32 %v774, %v767
        %v778 = vmul.f32 %v776, %v768
        %779 = vst [vmem:[%s328] sm:$0xff] %v777
        %780 = vst [vmem:[%s328 + $0x8] sm:$0xff] %v778
        %781 = vst [vmem:[#allocation2 - $0x7] sm:$0x80] %v606
        %782 = vst [vmem:[#allocation3 - $0x7] sm:$0x80] %v770
        %783 = vst [vmem:[#allocation4 - $0x7] sm:$0x80] %v768
        %s784 = sand.u32 %s164, 1
        %s785 = scalar_lea.sflag [#allocation7], %s784
        %s786 = sand.u32 %s164, 1
        %s787 = smul.addr %s786, 16
        %s788 = scalar_lea.vmem [#allocation13], %s787
        // Predicated region
        $region57: #{tpu_custom_call.1} parent=35 // pred_check
          %p789 = pneg %p174
        $region58: #{tpu_custom_call.1} parent=35 // pred_check_branch
          %791 = sbr.rel (%p789) target = $region60
        $region59: #{tpu_custom_call.1} parent=35 // pred_region
          %s792 = smul.u32 2, %s32
          %794 = vsyncadd %s785, 0
          %s795 = sadd.s32 %s30, %s792
          %s796 = smul.addr %s31, 2
          %s797 = sadd.s32 %s795, %s796
          %s798 = smul.addr %s797, 8
          %s799 = scalar_lea.hbm %s4, %s798
          %s800 = sshll.u32 %s788, 4
          %s801 = int_to_ptr.vmem [resolvable:$true] %s800
          %s802 = sshll.u32 %s799, 4
          %s803 = int_to_ptr.hbm [resolvable:$true] %s802
          %808 = dma.vmem_to_hbm [thread:$0]  %s801, 256, %s803, %s785, 128, 128, 8
        $region60: #{tpu_custom_call.1} parent=35 // pred_fallthru
          _
      $region36: #{tpu_custom_call.1} parent=5 // pred_fallthru
        _
      %p809 = scmp.le.s32.totalorder 2, %s20
      // Predicated region
      $region61: #{tpu_custom_call.1} parent=5 // pred_check
        %p810 = pneg %p809
      $region62: #{tpu_custom_call.1} parent=5 // pred_check_branch
        %812 = sbr.rel (%p810) target = $region64
      $region63: #{tpu_custom_call.1} parent=5 // pred_region
        %s813 = ssub.s32 %s20, 2
        // Predicated region
        $region65: #{tpu_custom_call.1} parent=63 // pred_check
          %p814 = pneg %p180
        $region66: #{tpu_custom_call.1} parent=63 // pred_check_branch
          %816 = sbr.rel (%p814) target = $region68
        $region67: #{tpu_custom_call.1} parent=63 // pred_region
          %s817 = sand.u32 %s165, 1
          %s818 = scalar_lea.sflag [#allocation7], %s817
          %s819 = sand.u32 %s165, 1
          %s820 = smul.addr %s819, 16
          %s821 = scalar_lea.vmem [#allocation13], %s820
          %823 = dma.done %s818, 256
        $region68: #{tpu_custom_call.1} parent=63 // pred_fallthru
          _
      $region64: #{tpu_custom_call.1} parent=5 // pred_fallthru
        _
    $region6: #{tpu_custom_call.1} parent=1 // loop_footer
      %s24 = sadd.s32 1, %s20
    $region7: #{tpu_custom_call.1} parent=1 // loop_footer_branch
      %19 = sbr.rel target = $region3
    $region8: #{tpu_custom_call.1} parent=1 // loop_exit
      _
    %824 = vsyncpa [#allocation6], 1
    %s825 = scalar_lea.sflag [#allocation6], 1
    %826 = vsyncpa %s825, 1
    %827 = vsyncpa [#allocation9], 1
    %s828 = scalar_lea.sflag [#allocation9], 1
    %829 = vsyncpa %s828, 1
    %830 = vsyncpa [#allocation12], 1
    %831 = vsyncpa [#allocation7], 1
    %s832 = scalar_lea.sflag [#allocation7], 1
    %833 = vsyncpa %s832, 1

</llo_original>
